<compile_context>
chip_gen: v6e
topology: v6e:2x2x1
jax: 0.10.0
libtpu: 0.0.40
codegen_flags: <defaults>
</compile_context>

<pallas_src>
import jax
import jax.numpy as jnp
from jax.experimental import pallas as pl
from jax.experimental.pallas import tpu as pltpu

IN_FEATURES = 8
OUT_FEATURES = 2
_C0 = 0.044715
_C1 = 0.7978845608028654


def _linear_gelu_kernel(w_ref, b_ref, x_ref, o_ref):
    # w_ref: SMEM (16,) f32 (row-major PyTorch weight, W[n, k] = w_ref[n*8+k])
    # b_ref: SMEM (2,)  f32
    # x_ref: VMEM (8, tile) f32  -- features on sublanes, rows on lanes
    # o_ref: VMEM (2, tile) f32  -- lane-dense output
    x = x_ref[...]                                    # (8, tile)
    rows = []
    for n in range(OUT_FEATURES):
        # Unrolled scalar*vector FMA chain (pure VPU, bias folded into init).
        acc = x[0:1, :] * w_ref[n * IN_FEATURES] + b_ref[n]
        for k in range(1, IN_FEATURES):
            acc = acc + x[k:k + 1, :] * w_ref[n * IN_FEATURES + k]
        rows.append(acc)
    v1 = jnp.concatenate(rows, axis=0)                # (2, tile)

    v3 = v1 + v1 * v1 * v1 * _C0
    v5 = jnp.tanh(v3 * _C1)                           # EUP
    o_ref[...] = (v1 * (v5 + 1.0)).astype(o_ref.dtype)


def _round_up(a, b):
    return ((a + b - 1) // b) * b


def linear_gelu(x, weight, bias, *, tile_m=16384):
    """x: (..., IN_FEATURES) float. weight: (OUT_FEATURES, IN_FEATURES)
    (PyTorch convention). bias: (OUT_FEATURES,). Returns (..., OUT_FEATURES)."""
    assert x.shape[-1] == IN_FEATURES
    lead_shape = x.shape[:-1]
    m = 1
    for d in lead_shape:
        m *= d

    # Lane-major view: (IN_FEATURES, M). Wrapper-side transpose is layout
    # plumbing; the kernel then streams lane-dense slabs.
    x2d = x.reshape(m, IN_FEATURES).astype(jnp.float32)
    xt = x2d.T                                        # (8, m)

    # Pick a lane-dense tile: multiple of 128, as large as possible, but aim
    # for >= 2 grid steps (megacore / dual-TC friendly) when M allows it.
    target = _round_up((m + 1) // 2, 128)
    tile = max(128, min(tile_m, target))
    m_pad = _round_up(m, tile)
    if m_pad != m:
        xt = jnp.pad(xt, ((0, 0), (0, m_pad - m)))

    w_flat = weight.astype(jnp.float32).reshape(-1)   # (16,) -> SMEM
    b_flat = bias.astype(jnp.float32).reshape(-1)     # (2,)  -> SMEM

    grid = (m_pad // tile,)

    out = pl.pallas_call(
        _linear_gelu_kernel,
        out_shape=jax.ShapeDtypeStruct((OUT_FEATURES, m_pad), jnp.float32),
        grid_spec=pltpu.PrefetchScalarGridSpec(
            num_scalar_prefetch=0,
            grid=grid,
            in_specs=[
                pl.BlockSpec(memory_space=pltpu.MemorySpace.SMEM),   # weights
                pl.BlockSpec(memory_space=pltpu.MemorySpace.SMEM),   # bias
                pl.BlockSpec((IN_FEATURES, tile), lambda i: (0, i)),  # x
            ],
            out_specs=pl.BlockSpec((OUT_FEATURES, tile), lambda i: (0, i)),
        ),
        compiler_params=pltpu.CompilerParams(
            dimension_semantics=("parallel",)),
    )(w_flat, b_flat, xt)

    out = out[:, :m].T                                # (m, 2)
    return out.reshape(*lead_shape, OUT_FEATURES)


def _reference(x, weight, bias):
    v1 = x @ weight.T + bias
    return v1 * (jnp.tanh(_C1 * (v1 + _C0 * v1 ** 3)) + 1.0)


if __name__ == "__main__":
    key = jax.random.PRNGKey(0)
    kx, kw, kb = jax.random.split(key, 3)

    # Channels-last interpretation of the spec's (1, 8, 64, 64) input:
    # Linear(8, 2) acts over the size-8 feature axis.
    x = jax.random.normal(kx, (1, 64, 64, IN_FEATURES), dtype=jnp.float32)

    # PyTorch Linear default init: U(-1/sqrt(in), 1/sqrt(in))
    bound = 1.0 / (IN_FEATURES ** 0.5)
    weight = jax.random.uniform(
        kw, (OUT_FEATURES, IN_FEATURES), minval=-bound, maxval=bound,
        dtype=jnp.float32)
    bias = jax.random.uniform(
        kb, (OUT_FEATURES,), minval=-bound, maxval=bound, dtype=jnp.float32)

    out = linear_gelu(x, weight, bias)
    out = jax.block_until_ready(out)
    assert out.shape == (1, 64, 64, OUT_FEATURES)
    assert jnp.allclose(out, _reference(x, weight, bias), atol=1e-5, rtol=1e-5)

    # Ragged leading shape (M not a multiple of 128) exercises the padding path.
    x_ragged = jax.random.normal(kx, (2, 3, 13, IN_FEATURES), dtype=jnp.float32)
    out_r = jax.block_until_ready(linear_gelu(x_ragged, weight, bias))
    assert out_r.shape == (2, 3, 13, OUT_FEATURES)
    assert jnp.allclose(out_r, _reference(x_ragged, weight, bias),
                        atol=1e-5, rtol=1e-5)

    print("KERNEL_OK")
</pallas_src>

<mosaic_0001>
module attributes {stable_mosaic.version = 11 : i64} {
  func.func @_linear_gelu_kernel(%arg0: i32, %arg1: memref<16xf32, #tpu.memory_space<smem>>, %arg2: memref<2xf32, #tpu.memory_space<smem>>, %arg3: memref<8x2048xf32, #tpu.memory_space<vmem>>, %arg4: memref<2x2048xf32, #tpu.memory_space<vmem>>) attributes {dimension_semantics = [#tpu.dimension_semantics<parallel>], iteration_bounds = array<i64: 2>, scalar_prefetch = 0 : i64, scratch_operands = 0 : i64, tpu.core_type = #tpu.core_type<tc>, window_params = [{transform_indices = @transform_0, window_bounds = array<i64: 16>}, {transform_indices = @transform_1, window_bounds = array<i64: 2>}, {transform_indices = @transform_2, window_bounds = array<i64: 8, 2048>}, {transform_indices = @transform_3, window_bounds = array<i64: 2, 2048>}]} {
    %c0 = arith.constant 0 : index
    %c0_0 = arith.constant 0 : index
    %0 = vector.load %arg3[%c0, %c0_0] : memref<8x2048xf32, #tpu.memory_space<vmem>>, vector<8x2048xf32>
    %1 = vector.extract_strided_slice %0 {offsets = [0, 0], sizes = [1, 2048], strides = [1, 1]} : vector<8x2048xf32> to vector<1x2048xf32>
    %c0_1 = arith.constant 0 : index
    %2 = memref.load %arg1[%c0_1] : memref<16xf32, #tpu.memory_space<smem>>
    %3 = vector.broadcast %2 : f32 to vector<1x2048xf32>
    %4 = arith.mulf %1, %3 : vector<1x2048xf32>
    %c0_2 = arith.constant 0 : index
    %5 = memref.load %arg2[%c0_2] : memref<2xf32, #tpu.memory_space<smem>>
    %6 = vector.broadcast %5 : f32 to vector<1x2048xf32>
    %7 = arith.addf %4, %6 : vector<1x2048xf32>
    %8 = vector.extract_strided_slice %0 {offsets = [1, 0], sizes = [1, 2048], strides = [1, 1]} : vector<8x2048xf32> to vector<1x2048xf32>
    %c1 = arith.constant 1 : index
    %9 = memref.load %arg1[%c1] : memref<16xf32, #tpu.memory_space<smem>>
    %10 = vector.broadcast %9 : f32 to vector<1x2048xf32>
    %11 = arith.mulf %8, %10 : vector<1x2048xf32>
    %12 = arith.addf %7, %11 : vector<1x2048xf32>
    %13 = vector.extract_strided_slice %0 {offsets = [2, 0], sizes = [1, 2048], strides = [1, 1]} : vector<8x2048xf32> to vector<1x2048xf32>
    %c2 = arith.constant 2 : index
    %14 = memref.load %arg1[%c2] : memref<16xf32, #tpu.memory_space<smem>>
    %15 = vector.broadcast %14 : f32 to vector<1x2048xf32>
    %16 = arith.mulf %13, %15 : vector<1x2048xf32>
    %17 = arith.addf %12, %16 : vector<1x2048xf32>
    %18 = vector.extract_strided_slice %0 {offsets = [3, 0], sizes = [1, 2048], strides = [1, 1]} : vector<8x2048xf32> to vector<1x2048xf32>
    %c3 = arith.constant 3 : index
    %19 = memref.load %arg1[%c3] : memref<16xf32, #tpu.memory_space<smem>>
    %20 = vector.broadcast %19 : f32 to vector<1x2048xf32>
    %21 = arith.mulf %18, %20 : vector<1x2048xf32>
    %22 = arith.addf %17, %21 : vector<1x2048xf32>
    %23 = vector.extract_strided_slice %0 {offsets = [4, 0], sizes = [1, 2048], strides = [1, 1]} : vector<8x2048xf32> to vector<1x2048xf32>
    %c4 = arith.constant 4 : index
    %24 = memref.load %arg1[%c4] : memref<16xf32, #tpu.memory_space<smem>>
    %25 = vector.broadcast %24 : f32 to vector<1x2048xf32>
    %26 = arith.mulf %23, %25 : vector<1x2048xf32>
    %27 = arith.addf %22, %26 : vector<1x2048xf32>
    %28 = vector.extract_strided_slice %0 {offsets = [5, 0], sizes = [1, 2048], strides = [1, 1]} : vector<8x2048xf32> to vector<1x2048xf32>
    %c5 = arith.constant 5 : index
    %29 = memref.load %arg1[%c5] : memref<16xf32, #tpu.memory_space<smem>>
    %30 = vector.broadcast %29 : f32 to vector<1x2048xf32>
    %31 = arith.mulf %28, %30 : vector<1x2048xf32>
    %32 = arith.addf %27, %31 : vector<1x2048xf32>
    %33 = vector.extract_strided_slice %0 {offsets = [6, 0], sizes = [1, 2048], strides = [1, 1]} : vector<8x2048xf32> to vector<1x2048xf32>
    %c6 = arith.constant 6 : index
    %34 = memref.load %arg1[%c6] : memref<16xf32, #tpu.memory_space<smem>>
    %35 = vector.broadcast %34 : f32 to vector<1x2048xf32>
    %36 = arith.mulf %33, %35 : vector<1x2048xf32>
    %37 = arith.addf %32, %36 : vector<1x2048xf32>
    %38 = vector.extract_strided_slice %0 {offsets = [7, 0], sizes = [1, 2048], strides = [1, 1]} : vector<8x2048xf32> to vector<1x2048xf32>
    %c7 = arith.constant 7 : index
    %39 = memref.load %arg1[%c7] : memref<16xf32, #tpu.memory_space<smem>>
    %40 = vector.broadcast %39 : f32 to vector<1x2048xf32>
    %41 = arith.mulf %38, %40 : vector<1x2048xf32>
    %42 = arith.addf %37, %41 : vector<1x2048xf32>
    %43 = vector.extract_strided_slice %0 {offsets = [0, 0], sizes = [1, 2048], strides = [1, 1]} : vector<8x2048xf32> to vector<1x2048xf32>
    %c8 = arith.constant 8 : index
    %44 = memref.load %arg1[%c8] : memref<16xf32, #tpu.memory_space<smem>>
    %45 = vector.broadcast %44 : f32 to vector<1x2048xf32>
    %46 = arith.mulf %43, %45 : vector<1x2048xf32>
    %c1_3 = arith.constant 1 : index
    %47 = memref.load %arg2[%c1_3] : memref<2xf32, #tpu.memory_space<smem>>
    %48 = vector.broadcast %47 : f32 to vector<1x2048xf32>
    %49 = arith.addf %46, %48 : vector<1x2048xf32>
    %50 = vector.extract_strided_slice %0 {offsets = [1, 0], sizes = [1, 2048], strides = [1, 1]} : vector<8x2048xf32> to vector<1x2048xf32>
    %c9 = arith.constant 9 : index
    %51 = memref.load %arg1[%c9] : memref<16xf32, #tpu.memory_space<smem>>
    %52 = vector.broadcast %51 : f32 to vector<1x2048xf32>
    %53 = arith.mulf %50, %52 : vector<1x2048xf32>
    %54 = arith.addf %49, %53 : vector<1x2048xf32>
    %55 = vector.extract_strided_slice %0 {offsets = [2, 0], sizes = [1, 2048], strides = [1, 1]} : vector<8x2048xf32> to vector<1x2048xf32>
    %c10 = arith.constant 10 : index
    %56 = memref.load %arg1[%c10] : memref<16xf32, #tpu.memory_space<smem>>
    %57 = vector.broadcast %56 : f32 to vector<1x2048xf32>
    %58 = arith.mulf %55, %57 : vector<1x2048xf32>
    %59 = arith.addf %54, %58 : vector<1x2048xf32>
    %60 = vector.extract_strided_slice %0 {offsets = [3, 0], sizes = [1, 2048], strides = [1, 1]} : vector<8x2048xf32> to vector<1x2048xf32>
    %c11 = arith.constant 11 : index
    %61 = memref.load %arg1[%c11] : memref<16xf32, #tpu.memory_space<smem>>
    %62 = vector.broadcast %61 : f32 to vector<1x2048xf32>
    %63 = arith.mulf %60, %62 : vector<1x2048xf32>
    %64 = arith.addf %59, %63 : vector<1x2048xf32>
    %65 = vector.extract_strided_slice %0 {offsets = [4, 0], sizes = [1, 2048], strides = [1, 1]} : vector<8x2048xf32> to vector<1x2048xf32>
    %c12 = arith.constant 12 : index
    %66 = memref.load %arg1[%c12] : memref<16xf32, #tpu.memory_space<smem>>
    %67 = vector.broadcast %66 : f32 to vector<1x2048xf32>
    %68 = arith.mulf %65, %67 : vector<1x2048xf32>
    %69 = arith.addf %64, %68 : vector<1x2048xf32>
    %70 = vector.extract_strided_slice %0 {offsets = [5, 0], sizes = [1, 2048], strides = [1, 1]} : vector<8x2048xf32> to vector<1x2048xf32>
    %c13 = arith.constant 13 : index
    %71 = memref.load %arg1[%c13] : memref<16xf32, #tpu.memory_space<smem>>
    %72 = vector.broadcast %71 : f32 to vector<1x2048xf32>
    %73 = arith.mulf %70, %72 : vector<1x2048xf32>
    %74 = arith.addf %69, %73 : vector<1x2048xf32>
    %75 = vector.extract_strided_slice %0 {offsets = [6, 0], sizes = [1, 2048], strides = [1, 1]} : vector<8x2048xf32> to vector<1x2048xf32>
    %c14 = arith.constant 14 : index
    %76 = memref.load %arg1[%c14] : memref<16xf32, #tpu.memory_space<smem>>
    %77 = vector.broadcast %76 : f32 to vector<1x2048xf32>
    %78 = arith.mulf %75, %77 : vector<1x2048xf32>
    %79 = arith.addf %74, %78 : vector<1x2048xf32>
    %80 = vector.extract_strided_slice %0 {offsets = [7, 0], sizes = [1, 2048], strides = [1, 1]} : vector<8x2048xf32> to vector<1x2048xf32>
    %c15 = arith.constant 15 : index
    %81 = memref.load %arg1[%c15] : memref<16xf32, #tpu.memory_space<smem>>
    %82 = vector.broadcast %81 : f32 to vector<1x2048xf32>
    %83 = arith.mulf %80, %82 : vector<1x2048xf32>
    %84 = arith.addf %79, %83 : vector<1x2048xf32>
    %85 = tpu.concatenate %42, %84 in 0 : vector<1x2048xf32>, vector<1x2048xf32> -> vector<2x2048xf32>
    %86 = arith.mulf %85, %85 : vector<2x2048xf32>
    %87 = arith.mulf %86, %85 : vector<2x2048xf32>
    %cst = arith.constant 4.471500e-02 : f32
    %88 = vector.broadcast %cst : f32 to vector<2x2048xf32>
    %89 = arith.mulf %87, %88 : vector<2x2048xf32>
    %90 = arith.addf %85, %89 : vector<2x2048xf32>
    %cst_4 = arith.constant 0.797884583 : f32
    %91 = vector.broadcast %cst_4 : f32 to vector<2x2048xf32>
    %92 = arith.mulf %90, %91 : vector<2x2048xf32>
    %93 = math.tanh %92 : vector<2x2048xf32>
    %cst_5 = arith.constant 1.000000e+00 : f32
    %94 = vector.broadcast %cst_5 : f32 to vector<2x2048xf32>
    %95 = arith.addf %93, %94 : vector<2x2048xf32>
    %96 = arith.mulf %85, %95 : vector<2x2048xf32>
    %c0_6 = arith.constant 0 : index
    %c0_7 = arith.constant 0 : index
    %97 = vector.load %arg4[%c0_6, %c0_7] : memref<2x2048xf32, #tpu.memory_space<vmem>>, vector<2x2048xf32>
    tpu.vector_store %arg4[%c0_6, %c0_7], %96 {strides = array<i32>} : memref<2x2048xf32, #tpu.memory_space<vmem>>, vector<2x2048xf32>,
    return
  }
  func.func @transform_0(%arg0: i32) -> i32 {
    %c0_i32 = arith.constant 0 : i32
    %c0_i32_0 = arith.constant 0 : i32
    return %c0_i32 : i32
  }
  func.func @transform_1(%arg0: i32) -> i32 {
    %c0_i32 = arith.constant 0 : i32
    %c0_i32_0 = arith.constant 0 : i32
    return %c0_i32 : i32
  }
  func.func @transform_2(%arg0: i32) -> (i32, i32) {
    %c0_i32 = arith.constant 0 : i32
    %c0_i32_0 = arith.constant 0 : i32
    return %c0_i32, %arg0 : i32, i32
  }
  func.func @transform_3(%arg0: i32) -> (i32, i32) {
    %c0_i32 = arith.constant 0 : i32
    %c0_i32_0 = arith.constant 0 : i32
    return %c0_i32, %arg0 : i32, i32
  }
}

</mosaic_0001>

<llo_original>
// kernel: tpu_custom_call.1
$region0: #{tpu_custom_call.1}
  #allocation0 [shape = 'u32[]', space=smem, size = 0x4, offset = 0x4, fixed_abs, tag = 'smem constant byte address 0x4 - core index']
  #allocation1 [shape = 'u32[144,128]{1,0:T(1,128)}', space=vmem, size = 0x12000, scoped, tag = 'internal scratch']
  %s0 = inlined_call_operand.hbm [shape: f32[16], index: 0, kind: input, shape index: {}]
  %s1 = inlined_call_operand.vmem [shape: f32[2], index: 1, kind: input, shape index: {}]
  %s2 = inlined_call_operand.hbm [shape: f32[8,4096], index: 2, kind: input, shape index: {}]
  %s3 = inlined_call_operand.hbm [shape: f32[2,4096], index: 3, kind: output, shape index: {}]
  %s4 = sld [smem:[#allocation0]]
  $region57: #{tpu_custom_call.1} parent=0
    _
  %s6 = ssub.s32 1, %s4
  %s7 = scalar_select 0, %s6, %s4
  $region1: #{tpu_custom_call.1} parent=0
    #allocation2 [shape = 'u8[512]{0}', space=smem, size = 0x200, scoped, tag = 'input window, operand 0, single buffered']
    #allocation3 [shape = 's32[2]{0}', space=sflag, size = 0x8, scoped, tag = 'scoped memory for tpu_custom_call.1']
    #allocation4 [shape = 's32[2]{0}', space=sflag, size = 0x8, scoped, tag = 'scoped memory for tpu_custom_call.1']
    #allocation5 [shape = 's32[2]{0}', space=sflag, size = 0x8, scoped, tag = 'scoped memory for tpu_custom_call.1']
    #allocation6 [shape = 's32[2]{0}', space=sflag, size = 0x8, scoped, tag = 'scoped memory for tpu_custom_call.1']
    #allocation7 [shape = 'u8[512]{0}', space=smem, size = 0x200, scoped, tag = 'input window, operand 1, single buffered']
    #allocation8 [shape = 'u8[131072]{0}', space=vmem, size = 0x20000, scoped, tag = 'input window, operand 2']
    #allocation9 [shape = 'u8[32768]{0}', space=vmem, size = 0x8000, scoped, tag = 'output window, operand 0']
    %8 = vsyncpa [#allocation5], 0
    %9 = vsyncpa [#allocation6], 0
    %10 = vsyncpa [#allocation3], 0
    %s11 = scalar_lea.sflag [#allocation3], 1
    %12 = vsyncpa %s11, 0
    %13 = vsyncpa [#allocation4], 0
    %s14 = scalar_lea.sflag [#allocation4], 1
    %15 = vsyncpa %s14, 0
    loop: start=0, step=1, limit=4
    $region2: #{tpu_custom_call.1} parent=1 // loop_pre_header
      _
    $region3: #{tpu_custom_call.1} parent=1 // loop_header
      %s17 = sphi 0, %s21
      %p18 = scmp.ge.s32.totalorder %s17, 4
      %s25 = sphi 0, %s25
      %s27 = sphi 0, %s25
      %s28 = sphi 0, %s27
      %s42 = sphi 0, %s28
      %s46 = sphi 0, %s46
      %s48 = sphi 0, %s46
      %s49 = sphi 0, %s48
      %s63 = sphi 0, %s49
      %s69 = sphi 0, %s71
      %s72 = sphi 0, %s69
      %s73 = sphi 0, %s72
      %s89 = sphi 0, %s73
      %s95 = sphi 0, %s97
      %s98 = sphi 0, %s95
      %s99 = sphi 0, %s98
      %s115 = sphi 0, %s99
    $region4: #{tpu_custom_call.1} parent=1 // loop_header_branch
      %20 = sbr.rel (%p18) target = $region8
    $region5: #{tpu_custom_call.1} parent=1 // loop_body
      %s22 = ssub.s32 %s17, 1
      %s23 = ssub.s32 %s17, 2
      %s24 = sadd.s32 %s17, 1
      %s26 = sadd.s32 %s25, 1
      %p29 = scmp.eq.s32.totalorder %s17, 1
      %p30 = scmp.ne.s32.totalorder %s25, %s27
      %p31 = scmp.eq.s32.totalorder %s17, 0
      %p32 = por %p30, %p31
      %p33 = scmp.ne.s32.totalorder %s25, %s27
      %p34 = scmp.eq.s32.totalorder %s22, 1
      %p35 = por %p33, %p34
      %p36 = scmp.ne.s32.totalorder %s27, %s28
      %p37 = scmp.eq.s32.totalorder %s22, 0
      %p38 = por %p36, %p37
      %p39 = scmp.ne.s32.totalorder %s27, %s28
      %p40 = scmp.eq.s32.totalorder %s23, 1
      %p41 = por %p39, %p40
      %p43 = scmp.ne.s32.totalorder %s28, %s42
      %p44 = scmp.eq.s32.totalorder %s23, 0
      %p45 = por %p43, %p44
      %s47 = sadd.s32 %s46, 1
      %p50 = scmp.eq.s32.totalorder %s17, 1
      %p51 = scmp.ne.s32.totalorder %s46, %s48
      %p52 = scmp.eq.s32.totalorder %s17, 0
      %p53 = por %p51, %p52
      %p54 = scmp.ne.s32.totalorder %s46, %s48
      %p55 = scmp.eq.s32.totalorder %s22, 1
      %p56 = por %p54, %p55
      %p57 = scmp.ne.s32.totalorder %s48, %s49
      %p58 = scmp.eq.s32.totalorder %s22, 0
      %p59 = por %p57, %p58
      %p60 = scmp.ne.s32.totalorder %s48, %s49
      %p61 = scmp.eq.s32.totalorder %s23, 1
      %p62 = por %p60, %p61
      %p64 = scmp.ne.s32.totalorder %s49, %s63
      %p65 = scmp.eq.s32.totalorder %s23, 0
      %p66 = por %p64, %p65
      %s67 = ssub.s32 %s17, %s24
      %p68 = scmp.eq.s32.totalorder %s67, 0
      %s70 = sadd.s32 %s69, 1
      %s71 = scalar_select %p68, %s69, %s70
      %p74 = pneg %p68
      %p75 = scmp.eq.s32.totalorder %s17, 1
      %p76 = por %p74, %p75
      %p77 = scmp.ne.s32.totalorder %s69, %s72
      %p78 = scmp.eq.s32.totalorder %s17, 0
      %p79 = por %p77, %p78
      %p80 = scmp.ne.s32.totalorder %s69, %s72
      %p81 = scmp.eq.s32.totalorder %s22, 1
      %p82 = por %p80, %p81
      %p83 = scmp.ne.s32.totalorder %s72, %s73
      %p84 = scmp.eq.s32.totalorder %s22, 0
      %p85 = por %p83, %p84
      %p86 = scmp.ne.s32.totalorder %s72, %s73
      %p87 = scmp.eq.s32.totalorder %s23, 1
      %p88 = por %p86, %p87
      %p90 = scmp.ne.s32.totalorder %s73, %s89
      %p91 = scmp.eq.s32.totalorder %s23, 0
      %p92 = por %p90, %p91
      %s93 = ssub.s32 %s17, %s24
      %p94 = scmp.eq.s32.totalorder %s93, 0
      %s96 = sadd.s32 %s95, 1
      %s97 = scalar_select %p94, %s95, %s96
      %p100 = pneg %p94
      %p101 = scmp.eq.s32.totalorder %s17, 1
      %p102 = por %p100, %p101
      %p103 = scmp.ne.s32.totalorder %s95, %s98
      %p104 = scmp.eq.s32.totalorder %s17, 0
      %p105 = por %p103, %p104
      %p106 = scmp.ne.s32.totalorder %s95, %s98
      %p107 = scmp.eq.s32.totalorder %s22, 1
      %p108 = por %p106, %p107
      %p109 = scmp.ne.s32.totalorder %s98, %s99
      %p110 = scmp.eq.s32.totalorder %s22, 0
      %p111 = por %p109, %p110
      %p112 = scmp.ne.s32.totalorder %s98, %s99
      %p113 = scmp.eq.s32.totalorder %s23, 1
      %p114 = por %p112, %p113
      %p116 = scmp.ne.s32.totalorder %s99, %s115
      %p117 = scmp.eq.s32.totalorder %s23, 0
      %p118 = por %p116, %p117
      %p119 = scmp.le.s32.totalorder 1, %s17
      %p120 = scmp.lt.s32.totalorder %s17, 3
      %p121 = pnand %p119, %p120
      %p122 = pneg %p121
      // Predicated region
      $region9: #{tpu_custom_call.1} parent=5 // pred_check
        _
      $region10: #{tpu_custom_call.1} parent=5 // pred_check_branch
        %124 = sbr.rel (%p121) target = $region12
      $region11: #{tpu_custom_call.1} parent=5 // pred_region
        %s125 = ssub.s32 %s17, 1
        // Predicated region
        $region13: #{tpu_custom_call.1} parent=11 // pred_check
          %p126 = pneg %p38
        $region14: #{tpu_custom_call.1} parent=11 // pred_check_branch
          %128 = sbr.rel (%p126) target = $region16
        $region15: #{tpu_custom_call.1} parent=11 // pred_region
          %s130 = ssub.s32 16, 16
          %131 = vsyncadd [#allocation5], %s130
          %134 = dma.hbm_to_smem %s0, 16, [#allocation2], [#allocation5]
        $region16: #{tpu_custom_call.1} parent=11 // pred_fallthru
          _
        // Predicated region
        $region17: #{tpu_custom_call.1} parent=11 // pred_check
          %p135 = pneg %p59
        $region18: #{tpu_custom_call.1} parent=11 // pred_check_branch
          %137 = sbr.rel (%p135) target = $region20
        $region19: #{tpu_custom_call.1} parent=11 // pred_region
          %s139 = ssub.s32 16, 16
          %140 = vsyncadd [#allocation6], %s139
          %s142 = sshll.u32 %s1, 4
          %s143 = int_to_ptr.vmem [resolvable:$true] %s142
          %145 = dma.vmem_to_smem %s143, 16, [#allocation7], [#allocation6]
        $region20: #{tpu_custom_call.1} parent=11 // pred_fallthru
          _
      $region12: #{tpu_custom_call.1} parent=5 // pred_fallthru
        _
      %p146 = scmp.lt.s32.totalorder %s17, 2
      // Predicated region
      $region21: #{tpu_custom_call.1} parent=5 // pred_check
        %p147 = pneg %p146
      $region22: #{tpu_custom_call.1} parent=5 // pred_check_branch
        %149 = sbr.rel (%p147) target = $region24
      $region23: #{tpu_custom_call.1} parent=5 // pred_region
        // Predicated region
        $region25: #{tpu_custom_call.1} parent=23 // pred_check
          %p150 = pneg %p79
        $region26: #{tpu_custom_call.1} parent=23 // pred_check_branch
          %152 = sbr.rel (%p150) target = $region28
        $region27: #{tpu_custom_call.1} parent=23 // pred_region
          %s153 = sand.u32 %s69, 1
          %s154 = scalar_lea.sflag [#allocation3], %s153
          %s155 = sand.u32 %s69, 1
          %s156 = smul.addr %s155, 128
          %s157 = scalar_lea.vmem [#allocation8], %s156
          %s158 = smul.u32 16, %s17
          %s160 = ssub.s32 2048, 2048
          %161 = vsyncadd %s154, %s160
          %s162 = smul.addr %s158, 128
          %s163 = scalar_lea.hbm %s2, %s162
          %s165 = sshll.u32 %s157, 4
          %s166 = int_to_ptr.vmem [resolvable:$true] %s165
          %168 = dma.hbm_to_vmem [thread:$0]  %s163, 2048, %s166, %s154
        $region28: #{tpu_custom_call.1} parent=23 // pred_fallthru
          _
      $region24: #{tpu_custom_call.1} parent=5 // pred_fallthru
        _
      %p169 = scmp.le.s32.totalorder 1, %s17
      %p170 = scmp.lt.s32.totalorder %s17, 3
      %p171 = pnand %p169, %p170
      %p172 = pneg %p171
      // Predicated region
      $region29: #{tpu_custom_call.1} parent=5 // pred_check
        _
      $region30: #{tpu_custom_call.1} parent=5 // pred_check_branch
        %174 = sbr.rel (%p171) target = $region32
      $region31: #{tpu_custom_call.1} parent=5 // pred_region
        %s175 = ssub.s32 %s17, 1
        // Predicated region
        $region33: #{tpu_custom_call.1} parent=31 // pred_check
          %p176 = pneg %p38
        $region34: #{tpu_custom_call.1} parent=31 // pred_check_branch
          %178 = sbr.rel (%p176) target = $region36
        $region35: #{tpu_custom_call.1} parent=31 // pred_region
          %179 = dma.done [#allocation5], 16
        $region36: #{tpu_custom_call.1} parent=31 // pred_fallthru
          _
        // Predicated region
        $region37: #{tpu_custom_call.1} parent=31 // pred_check
          %p180 = pneg %p59
        $region38: #{tpu_custom_call.1} parent=31 // pred_check_branch
          %182 = sbr.rel (%p180) target = $region40
        $region39: #{tpu_custom_call.1} parent=31 // pred_region
          %183 = dma.done [#allocation6], 16
        $region40: #{tpu_custom_call.1} parent=31 // pred_fallthru
          _
        %s184 = sand.u32 %s72, 1
        %s185 = scalar_lea.sflag [#allocation3], %s184
        %s186 = sand.u32 %s72, 1
        %s187 = smul.addr %s186, 128
        %s188 = scalar_lea.vmem [#allocation8], %s187
        // Predicated region
        $region41: #{tpu_custom_call.1} parent=31 // pred_check
          %p189 = pneg %p85
        $region42: #{tpu_custom_call.1} parent=31 // pred_check_branch
          %191 = sbr.rel (%p189) target = $region44
        $region43: #{tpu_custom_call.1} parent=31 // pred_region
          %192 = dma.done %s185, 2048
        $region44: #{tpu_custom_call.1} parent=31 // pred_fallthru
          _
        %193 = sfence
        %p194 = pneg %p38
        %p195 = pneg %p35
        %p196 = pneg %p59
        %p197 = pneg %p56
        %s198 = sand.u32 %s72, 1
        %s199 = scalar_lea.sflag [#allocation3], %s198
        %s200 = sand.u32 %s72, 1
        %s201 = smul.addr %s200, 128
        %s202 = scalar_lea.vmem [#allocation8], %s201
        %p203 = pneg %p85
        %p204 = pneg %p82
        %p205 = pneg %p111
        %p206 = pneg %p108
        %s207 = sand.u32 %s98, 1
        %s208 = scalar_lea.sflag [#allocation4], %s207
        %s209 = sand.u32 %s98, 1
        %s210 = smul.addr %s209, 32
        %s211 = scalar_lea.vmem [#allocation9], %s210
        %s212 = smul.u32 16, %s22
        %s213 = smul.u32 16, %s22
        %v214 = vld [vmem:[%s188] sm:$0xff]
        %v215 = vld [vmem:[%s188 + $0x8] sm:$0xff]
        %v216 = vld [vmem:[%s188 + $0x10] sm:$0xff]
        %v217 = vld [vmem:[%s188 + $0x18] sm:$0xff]
        %v218 = vld [vmem:[%s188 + $0x20] sm:$0xff]
        %v219 = vld [vmem:[%s188 + $0x28] sm:$0xff]
        %v220 = vld [vmem:[%s188 + $0x30] sm:$0xff]
        %v221 = vld [vmem:[%s188 + $0x38] sm:$0xff]
        %v222 = vld [vmem:[%s188 + $0x40] sm:$0xff]
        %v223 = vld [vmem:[%s188 + $0x48] sm:$0xff]
        %v224 = vld [vmem:[%s188 + $0x50] sm:$0xff]
        %v225 = vld [vmem:[%s188 + $0x58] sm:$0xff]
        %v226 = vld [vmem:[%s188 + $0x60] sm:$0xff]
        %v227 = vld [vmem:[%s188 + $0x68] sm:$0xff]
        %v228 = vld [vmem:[%s188 + $0x70] sm:$0xff]
        %v229 = vld [vmem:[%s188 + $0x78] sm:$0xff]
        %s230 = sld [smem:[#allocation2]]
        %v231 = vstv %s230
        %v232 = vmul.f32 %v214, %v231
        %v233 = vmul.f32 %v215, %v231
        %v234 = vmul.f32 %v216, %v231
        %v235 = vmul.f32 %v217, %v231
        %v236 = vmul.f32 %v218, %v231
        %v237 = vmul.f32 %v219, %v231
        %v238 = vmul.f32 %v220, %v231
        %v239 = vmul.f32 %v221, %v231
        %v240 = vmul.f32 %v222, %v231
        %v241 = vmul.f32 %v223, %v231
        %v242 = vmul.f32 %v224, %v231
        %v243 = vmul.f32 %v225, %v231
        %v244 = vmul.f32 %v226, %v231
        %v245 = vmul.f32 %v227, %v231
        %v246 = vmul.f32 %v228, %v231
        %v247 = vmul.f32 %v229, %v231
        %s248 = sld [smem:[#allocation7]]
        %v249 = vstv %s248
        %v250 = vadd.f32 %v232, %v249
        %v251 = vadd.f32 %v233, %v249
        %v252 = vadd.f32 %v234, %v249
        %v253 = vadd.f32 %v235, %v249
        %v254 = vadd.f32 %v236, %v249
        %v255 = vadd.f32 %v237, %v249
        %v256 = vadd.f32 %v238, %v249
        %v257 = vadd.f32 %v239, %v249
        %v258 = vadd.f32 %v240, %v249
        %v259 = vadd.f32 %v241, %v249
        %v260 = vadd.f32 %v242, %v249
        %v261 = vadd.f32 %v243, %v249
        %v262 = vadd.f32 %v244, %v249
        %v263 = vadd.f32 %v245, %v249
        %v264 = vadd.f32 %v246, %v249
        %v265 = vadd.f32 %v247, %v249
        %s266 = sld [smem:[#allocation2 + $0x1]]
        %v267 = vstv %s266
        %v268 = vmul.f32 %v214, %v267
        %v269 = vmul.f32 %v215, %v267
        %v270 = vmul.f32 %v216, %v267
        %v271 = vmul.f32 %v217, %v267
        %v272 = vmul.f32 %v218, %v267
        %v273 = vmul.f32 %v219, %v267
        %v274 = vmul.f32 %v220, %v267
        %v275 = vmul.f32 %v221, %v267
        %v276 = vmul.f32 %v222, %v267
        %v277 = vmul.f32 %v223, %v267
        %v278 = vmul.f32 %v224, %v267
        %v279 = vmul.f32 %v225, %v267
        %v280 = vmul.f32 %v226, %v267
        %v281 = vmul.f32 %v227, %v267
        %v282 = vmul.f32 %v228, %v267
        %v283 = vmul.f32 %v229, %v267
        %v300 = vrot.slane %v268, 1
        %v301 = vrot.slane %v269, 1
        %v302 = vrot.slane %v270, 1
        %v303 = vrot.slane %v271, 1
        %v304 = vrot.slane %v272, 1
        %v305 = vrot.slane %v273, 1
        %v306 = vrot.slane %v274, 1
        %v307 = vrot.slane %v275, 1
        %v308 = vrot.slane %v276, 1
        %v309 = vrot.slane %v277, 1
        %v310 = vrot.slane %v278, 1
        %v311 = vrot.slane %v279, 1
        %v312 = vrot.slane %v280, 1
        %v313 = vrot.slane %v281, 1
        %v314 = vrot.slane %v282, 1
        %v315 = vrot.slane %v283, 1
        %v332 = vadd.f32 %v250, %v300
        %v333 = vadd.f32 %v251, %v301
        %v334 = vadd.f32 %v252, %v302
        %v335 = vadd.f32 %v253, %v303
        %v336 = vadd.f32 %v254, %v304
        %v337 = vadd.f32 %v255, %v305
        %v338 = vadd.f32 %v256, %v306
        %v339 = vadd.f32 %v257, %v307
        %v340 = vadd.f32 %v258, %v308
        %v341 = vadd.f32 %v259, %v309
        %v342 = vadd.f32 %v260, %v310
        %v343 = vadd.f32 %v261, %v311
        %v344 = vadd.f32 %v262, %v312
        %v345 = vadd.f32 %v263, %v313
        %v346 = vadd.f32 %v264, %v314
        %v347 = vadd.f32 %v265, %v315
        %s348 = sld [smem:[#allocation2 + $0x2]]
        %v349 = vstv %s348
        %v350 = vmul.f32 %v214, %v349
        %v351 = vmul.f32 %v215, %v349
        %v352 = vmul.f32 %v216, %v349
        %v353 = vmul.f32 %v217, %v349
        %v354 = vmul.f32 %v218, %v349
        %v355 = vmul.f32 %v219, %v349
        %v356 = vmul.f32 %v220, %v349
        %v357 = vmul.f32 %v221, %v349
        %v358 = vmul.f32 %v222, %v349
        %v359 = vmul.f32 %v223, %v349
        %v360 = vmul.f32 %v224, %v349
        %v361 = vmul.f32 %v225, %v349
        %v362 = vmul.f32 %v226, %v349
        %v363 = vmul.f32 %v227, %v349
        %v364 = vmul.f32 %v228, %v349
        %v365 = vmul.f32 %v229, %v349
        %v382 = vrot.slane %v350, 2
        %v383 = vrot.slane %v351, 2
        %v384 = vrot.slane %v352, 2
        %v385 = vrot.slane %v353, 2
        %v386 = vrot.slane %v354, 2
        %v387 = vrot.slane %v355, 2
        %v388 = vrot.slane %v356, 2
        %v389 = vrot.slane %v357, 2
        %v390 = vrot.slane %v358, 2
        %v391 = vrot.slane %v359, 2
        %v392 = vrot.slane %v360, 2
        %v393 = vrot.slane %v361, 2
        %v394 = vrot.slane %v362, 2
        %v395 = vrot.slane %v363, 2
        %v396 = vrot.slane %v364, 2
        %v397 = vrot.slane %v365, 2
        %v414 = vadd.f32 %v332, %v382
        %v415 = vadd.f32 %v333, %v383
        %v416 = vadd.f32 %v334, %v384
        %v417 = vadd.f32 %v335, %v385
        %v418 = vadd.f32 %v336, %v386
        %v419 = vadd.f32 %v337, %v387
        %v420 = vadd.f32 %v338, %v388
        %v421 = vadd.f32 %v339, %v389
        %v422 = vadd.f32 %v340, %v390
        %v423 = vadd.f32 %v341, %v391
        %v424 = vadd.f32 %v342, %v392
        %v425 = vadd.f32 %v343, %v393
        %v426 = vadd.f32 %v344, %v394
        %v427 = vadd.f32 %v345, %v395
        %v428 = vadd.f32 %v346, %v396
        %v429 = vadd.f32 %v347, %v397
        %s430 = sld [smem:[#allocation2 + $0x3]]
        %v431 = vstv %s430
        %v432 = vmul.f32 %v214, %v431
        %v433 = vmul.f32 %v215, %v431
        %v434 = vmul.f32 %v216, %v431
        %v435 = vmul.f32 %v217, %v431
        %v436 = vmul.f32 %v218, %v431
        %v437 = vmul.f32 %v219, %v431
        %v438 = vmul.f32 %v220, %v431
        %v439 = vmul.f32 %v221, %v431
        %v440 = vmul.f32 %v222, %v431
        %v441 = vmul.f32 %v223, %v431
        %v442 = vmul.f32 %v224, %v431
        %v443 = vmul.f32 %v225, %v431
        %v444 = vmul.f32 %v226, %v431
        %v445 = vmul.f32 %v227, %v431
        %v446 = vmul.f32 %v228, %v431
        %v447 = vmul.f32 %v229, %v431
        %v464 = vrot.slane %v432, 3
        %v465 = vrot.slane %v433, 3
        %v466 = vrot.slane %v434, 3
        %v467 = vrot.slane %v435, 3
        %v468 = vrot.slane %v436, 3
        %v469 = vrot.slane %v437, 3
        %v470 = vrot.slane %v438, 3
        %v471 = vrot.slane %v439, 3
        %v472 = vrot.slane %v440, 3
        %v473 = vrot.slane %v441, 3
        %v474 = vrot.slane %v442, 3
        %v475 = vrot.slane %v443, 3
        %v476 = vrot.slane %v444, 3
        %v477 = vrot.slane %v445, 3
        %v478 = vrot.slane %v446, 3
        %v479 = vrot.slane %v447, 3
        %v496 = vadd.f32 %v414, %v464
        %v497 = vadd.f32 %v415, %v465
        %v498 = vadd.f32 %v416, %v466
        %v499 = vadd.f32 %v417, %v467
        %v500 = vadd.f32 %v418, %v468
        %v501 = vadd.f32 %v419, %v469
        %v502 = vadd.f32 %v420, %v470
        %v503 = vadd.f32 %v421, %v471
        %v504 = vadd.f32 %v422, %v472
        %v505 = vadd.f32 %v423, %v473
        %v506 = vadd.f32 %v424, %v474
        %v507 = vadd.f32 %v425, %v475
        %v508 = vadd.f32 %v426, %v476
        %v509 = vadd.f32 %v427, %v477
        %v510 = vadd.f32 %v428, %v478
        %v511 = vadd.f32 %v429, %v479
        %s512 = sld [smem:[#allocation2 + $0x4]]
        %v513 = vstv %s512
        %v514 = vmul.f32 %v214, %v513
        %v515 = vmul.f32 %v215, %v513
        %v516 = vmul.f32 %v216, %v513
        %v517 = vmul.f32 %v217, %v513
        %v518 = vmul.f32 %v218, %v513
        %v519 = vmul.f32 %v219, %v513
        %v520 = vmul.f32 %v220, %v513
        %v521 = vmul.f32 %v221, %v513
        %v522 = vmul.f32 %v222, %v513
        %v523 = vmul.f32 %v223, %v513
        %v524 = vmul.f32 %v224, %v513
        %v525 = vmul.f32 %v225, %v513
        %v526 = vmul.f32 %v226, %v513
        %v527 = vmul.f32 %v227, %v513
        %v528 = vmul.f32 %v228, %v513
        %v529 = vmul.f32 %v229, %v513
        %v546 = vrot.slane %v514, 4
        %v547 = vrot.slane %v515, 4
        %v548 = vrot.slane %v516, 4
        %v549 = vrot.slane %v517, 4
        %v550 = vrot.slane %v518, 4
        %v551 = vrot.slane %v519, 4
        %v552 = vrot.slane %v520, 4
        %v553 = vrot.slane %v521, 4
        %v554 = vrot.slane %v522, 4
        %v555 = vrot.slane %v523, 4
        %v556 = vrot.slane %v524, 4
        %v557 = vrot.slane %v525, 4
        %v558 = vrot.slane %v526, 4
        %v559 = vrot.slane %v527, 4
        %v560 = vrot.slane %v528, 4
        %v561 = vrot.slane %v529, 4
        %v578 = vadd.f32 %v496, %v546
        %v579 = vadd.f32 %v497, %v547
        %v580 = vadd.f32 %v498, %v548
        %v581 = vadd.f32 %v499, %v549
        %v582 = vadd.f32 %v500, %v550
        %v583 = vadd.f32 %v501, %v551
        %v584 = vadd.f32 %v502, %v552
        %v585 = vadd.f32 %v503, %v553
        %v586 = vadd.f32 %v504, %v554
        %v587 = vadd.f32 %v505, %v555
        %v588 = vadd.f32 %v506, %v556
        %v589 = vadd.f32 %v507, %v557
        %v590 = vadd.f32 %v508, %v558
        %v591 = vadd.f32 %v509, %v559
        %v592 = vadd.f32 %v510, %v560
        %v593 = vadd.f32 %v511, %v561
        %s594 = sld [smem:[#allocation2 + $0x5]]
        %v595 = vstv %s594
        %v596 = vmul.f32 %v214, %v595
        %v597 = vmul.f32 %v215, %v595
        %v598 = vmul.f32 %v216, %v595
        %v599 = vmul.f32 %v217, %v595
        %v600 = vmul.f32 %v218, %v595
        %v601 = vmul.f32 %v219, %v595
        %v602 = vmul.f32 %v220, %v595
        %v603 = vmul.f32 %v221, %v595
        %v604 = vmul.f32 %v222, %v595
        %v605 = vmul.f32 %v223, %v595
        %v606 = vmul.f32 %v224, %v595
        %v607 = vmul.f32 %v225, %v595
        %v608 = vmul.f32 %v226, %v595
        %v609 = vmul.f32 %v227, %v595
        %v610 = vmul.f32 %v228, %v595
        %v611 = vmul.f32 %v229, %v595
        %v628 = vrot.slane %v596, 5
        %v629 = vrot.slane %v597, 5
        %v630 = vrot.slane %v598, 5
        %v631 = vrot.slane %v599, 5
        %v632 = vrot.slane %v600, 5
        %v633 = vrot.slane %v601, 5
        %v634 = vrot.slane %v602, 5
        %v635 = vrot.slane %v603, 5
        %v636 = vrot.slane %v604, 5
        %v637 = vrot.slane %v605, 5
        %v638 = vrot.slane %v606, 5
        %v639 = vrot.slane %v607, 5
        %v640 = vrot.slane %v608, 5
        %v641 = vrot.slane %v609, 5
        %v642 = vrot.slane %v610, 5
        %v643 = vrot.slane %v611, 5
        %v660 = vadd.f32 %v578, %v628
        %v661 = vadd.f32 %v579, %v629
        %v662 = vadd.f32 %v580, %v630
        %v663 = vadd.f32 %v581, %v631
        %v664 = vadd.f32 %v582, %v632
        %v665 = vadd.f32 %v583, %v633
        %v666 = vadd.f32 %v584, %v634
        %v667 = vadd.f32 %v585, %v635
        %v668 = vadd.f32 %v586, %v636
        %v669 = vadd.f32 %v587, %v637
        %v670 = vadd.f32 %v588, %v638
        %v671 = vadd.f32 %v589, %v639
        %v672 = vadd.f32 %v590, %v640
        %v673 = vadd.f32 %v591, %v641
        %v674 = vadd.f32 %v592, %v642
        %v675 = vadd.f32 %v593, %v643
        %s676 = sld [smem:[#allocation2 + $0x6]]
        %v677 = vstv %s676
        %v678 = vmul.f32 %v214, %v677
        %v679 = vmul.f32 %v215, %v677
        %v680 = vmul.f32 %v216, %v677
        %v681 = vmul.f32 %v217, %v677
        %v682 = vmul.f32 %v218, %v677
        %v683 = vmul.f32 %v219, %v677
        %v684 = vmul.f32 %v220, %v677
        %v685 = vmul.f32 %v221, %v677
        %v686 = vmul.f32 %v222, %v677
        %v687 = vmul.f32 %v223, %v677
        %v688 = vmul.f32 %v224, %v677
        %v689 = vmul.f32 %v225, %v677
        %v690 = vmul.f32 %v226, %v677
        %v691 = vmul.f32 %v227, %v677
        %v692 = vmul.f32 %v228, %v677
        %v693 = vmul.f32 %v229, %v677
        %v710 = vrot.slane %v678, 6
        %v711 = vrot.slane %v679, 6
        %v712 = vrot.slane %v680, 6
        %v713 = vrot.slane %v681, 6
        %v714 = vrot.slane %v682, 6
        %v715 = vrot.slane %v683, 6
        %v716 = vrot.slane %v684, 6
        %v717 = vrot.slane %v685, 6
        %v718 = vrot.slane %v686, 6
        %v719 = vrot.slane %v687, 6
        %v720 = vrot.slane %v688, 6
        %v721 = vrot.slane %v689, 6
        %v722 = vrot.slane %v690, 6
        %v723 = vrot.slane %v691, 6
        %v724 = vrot.slane %v692, 6
        %v725 = vrot.slane %v693, 6
        %v742 = vadd.f32 %v660, %v710
        %v743 = vadd.f32 %v661, %v711
        %v744 = vadd.f32 %v662, %v712
        %v745 = vadd.f32 %v663, %v713
        %v746 = vadd.f32 %v664, %v714
        %v747 = vadd.f32 %v665, %v715
        %v748 = vadd.f32 %v666, %v716
        %v749 = vadd.f32 %v667, %v717
        %v750 = vadd.f32 %v668, %v718
        %v751 = vadd.f32 %v669, %v719
        %v752 = vadd.f32 %v670, %v720
        %v753 = vadd.f32 %v671, %v721
        %v754 = vadd.f32 %v672, %v722
        %v755 = vadd.f32 %v673, %v723
        %v756 = vadd.f32 %v674, %v724
        %v757 = vadd.f32 %v675, %v725
        %s758 = sld [smem:[#allocation2 + $0x7]]
        %v759 = vstv %s758
        %v760 = vmul.f32 %v214, %v759
        %v761 = vmul.f32 %v215, %v759
        %v762 = vmul.f32 %v216, %v759
        %v763 = vmul.f32 %v217, %v759
        %v764 = vmul.f32 %v218, %v759
        %v765 = vmul.f32 %v219, %v759
        %v766 = vmul.f32 %v220, %v759
        %v767 = vmul.f32 %v221, %v759
        %v768 = vmul.f32 %v222, %v759
        %v769 = vmul.f32 %v223, %v759
        %v770 = vmul.f32 %v224, %v759
        %v771 = vmul.f32 %v225, %v759
        %v772 = vmul.f32 %v226, %v759
        %v773 = vmul.f32 %v227, %v759
        %v774 = vmul.f32 %v228, %v759
        %v775 = vmul.f32 %v229, %v759
        %v792 = vrot.slane %v760, 7
        %v793 = vrot.slane %v761, 7
        %v794 = vrot.slane %v762, 7
        %v795 = vrot.slane %v763, 7
        %v796 = vrot.slane %v764, 7
        %v797 = vrot.slane %v765, 7
        %v798 = vrot.slane %v766, 7
        %v799 = vrot.slane %v767, 7
        %v800 = vrot.slane %v768, 7
        %v801 = vrot.slane %v769, 7
        %v802 = vrot.slane %v770, 7
        %v803 = vrot.slane %v771, 7
        %v804 = vrot.slane %v772, 7
        %v805 = vrot.slane %v773, 7
        %v806 = vrot.slane %v774, 7
        %v807 = vrot.slane %v775, 7
        %v824 = vadd.f32 %v742, %v792
        %v825 = vadd.f32 %v743, %v793
        %v826 = vadd.f32 %v744, %v794
        %v827 = vadd.f32 %v745, %v795
        %v828 = vadd.f32 %v746, %v796
        %v829 = vadd.f32 %v747, %v797
        %v830 = vadd.f32 %v748, %v798
        %v831 = vadd.f32 %v749, %v799
        %v832 = vadd.f32 %v750, %v800
        %v833 = vadd.f32 %v751, %v801
        %v834 = vadd.f32 %v752, %v802
        %v835 = vadd.f32 %v753, %v803
        %v836 = vadd.f32 %v754, %v804
        %v837 = vadd.f32 %v755, %v805
        %v838 = vadd.f32 %v756, %v806
        %v839 = vadd.f32 %v757, %v807
        %s840 = sld [smem:[#allocation2 + $0x8]]
        %v841 = vstv %s840
        %v842 = vmul.f32 %v214, %v841
        %v843 = vmul.f32 %v215, %v841
        %v844 = vmul.f32 %v216, %v841
        %v845 = vmul.f32 %v217, %v841
        %v846 = vmul.f32 %v218, %v841
        %v847 = vmul.f32 %v219, %v841
        %v848 = vmul.f32 %v220, %v841
        %v849 = vmul.f32 %v221, %v841
        %v850 = vmul.f32 %v222, %v841
        %v851 = vmul.f32 %v223, %v841
        %v852 = vmul.f32 %v224, %v841
        %v853 = vmul.f32 %v225, %v841
        %v854 = vmul.f32 %v226, %v841
        %v855 = vmul.f32 %v227, %v841
        %v856 = vmul.f32 %v228, %v841
        %v857 = vmul.f32 %v229, %v841
        %s858 = sld [smem:[#allocation7 + $0x1]]
        %v859 = vstv %s858
        %v860 = vadd.f32 %v842, %v859
        %v861 = vadd.f32 %v843, %v859
        %v862 = vadd.f32 %v844, %v859
        %v863 = vadd.f32 %v845, %v859
        %v864 = vadd.f32 %v846, %v859
        %v865 = vadd.f32 %v847, %v859
        %v866 = vadd.f32 %v848, %v859
        %v867 = vadd.f32 %v849, %v859
        %v868 = vadd.f32 %v850, %v859
        %v869 = vadd.f32 %v851, %v859
        %v870 = vadd.f32 %v852, %v859
        %v871 = vadd.f32 %v853, %v859
        %v872 = vadd.f32 %v854, %v859
        %v873 = vadd.f32 %v855, %v859
        %v874 = vadd.f32 %v856, %v859
        %v875 = vadd.f32 %v857, %v859
        %s876 = sld [smem:[#allocation2 + $0x9]]
        %v877 = vstv %s876
        %v878 = vmul.f32 %v214, %v877
        %v879 = vmul.f32 %v215, %v877
        %v880 = vmul.f32 %v216, %v877
        %v881 = vmul.f32 %v217, %v877
        %v882 = vmul.f32 %v218, %v877
        %v883 = vmul.f32 %v219, %v877
        %v884 = vmul.f32 %v220, %v877
        %v885 = vmul.f32 %v221, %v877
        %v886 = vmul.f32 %v222, %v877
        %v887 = vmul.f32 %v223, %v877
        %v888 = vmul.f32 %v224, %v877
        %v889 = vmul.f32 %v225, %v877
        %v890 = vmul.f32 %v226, %v877
        %v891 = vmul.f32 %v227, %v877
        %v892 = vmul.f32 %v228, %v877
        %v893 = vmul.f32 %v229, %v877
        %v910 = vrot.slane %v878, 1
        %v911 = vrot.slane %v879, 1
        %v912 = vrot.slane %v880, 1
        %v913 = vrot.slane %v881, 1
        %v914 = vrot.slane %v882, 1
        %v915 = vrot.slane %v883, 1
        %v916 = vrot.slane %v884, 1
        %v917 = vrot.slane %v885, 1
        %v918 = vrot.slane %v886, 1
        %v919 = vrot.slane %v887, 1
        %v920 = vrot.slane %v888, 1
        %v921 = vrot.slane %v889, 1
        %v922 = vrot.slane %v890, 1
        %v923 = vrot.slane %v891, 1
        %v924 = vrot.slane %v892, 1
        %v925 = vrot.slane %v893, 1
        %v942 = vadd.f32 %v860, %v910
        %v943 = vadd.f32 %v861, %v911
        %v944 = vadd.f32 %v862, %v912
        %v945 = vadd.f32 %v863, %v913
        %v946 = vadd.f32 %v864, %v914
        %v947 = vadd.f32 %v865, %v915
        %v948 = vadd.f32 %v866, %v916
        %v949 = vadd.f32 %v867, %v917
        %v950 = vadd.f32 %v868, %v918
        %v951 = vadd.f32 %v869, %v919
        %v952 = vadd.f32 %v870, %v920
        %v953 = vadd.f32 %v871, %v921
        %v954 = vadd.f32 %v872, %v922
        %v955 = vadd.f32 %v873, %v923
        %v956 = vadd.f32 %v874, %v924
        %v957 = vadd.f32 %v875, %v925
        %s958 = sld [smem:[#allocation2 + $0xa]]
        %v959 = vstv %s958
        %v960 = vmul.f32 %v214, %v959
        %v961 = vmul.f32 %v215, %v959
        %v962 = vmul.f32 %v216, %v959
        %v963 = vmul.f32 %v217, %v959
        %v964 = vmul.f32 %v218, %v959
        %v965 = vmul.f32 %v219, %v959
        %v966 = vmul.f32 %v220, %v959
        %v967 = vmul.f32 %v221, %v959
        %v968 = vmul.f32 %v222, %v959
        %v969 = vmul.f32 %v223, %v959
        %v970 = vmul.f32 %v224, %v959
        %v971 = vmul.f32 %v225, %v959
        %v972 = vmul.f32 %v226, %v959
        %v973 = vmul.f32 %v227, %v959
        %v974 = vmul.f32 %v228, %v959
        %v975 = vmul.f32 %v229, %v959
        %v992 = vrot.slane %v960, 2
        %v993 = vrot.slane %v961, 2
        %v994 = vrot.slane %v962, 2
        %v995 = vrot.slane %v963, 2
        %v996 = vrot.slane %v964, 2
        %v997 = vrot.slane %v965, 2
        %v998 = vrot.slane %v966, 2
        %v999 = vrot.slane %v967, 2
        %v1000 = vrot.slane %v968, 2
        %v1001 = vrot.slane %v969, 2
        %v1002 = vrot.slane %v970, 2
        %v1003 = vrot.slane %v971, 2
        %v1004 = vrot.slane %v972, 2
        %v1005 = vrot.slane %v973, 2
        %v1006 = vrot.slane %v974, 2
        %v1007 = vrot.slane %v975, 2
        %v1024 = vadd.f32 %v942, %v992
        %v1025 = vadd.f32 %v943, %v993
        %v1026 = vadd.f32 %v944, %v994
        %v1027 = vadd.f32 %v945, %v995
        %v1028 = vadd.f32 %v946, %v996
        %v1029 = vadd.f32 %v947, %v997
        %v1030 = vadd.f32 %v948, %v998
        %v1031 = vadd.f32 %v949, %v999
        %v1032 = vadd.f32 %v950, %v1000
        %v1033 = vadd.f32 %v951, %v1001
        %v1034 = vadd.f32 %v952, %v1002
        %v1035 = vadd.f32 %v953, %v1003
        %v1036 = vadd.f32 %v954, %v1004
        %v1037 = vadd.f32 %v955, %v1005
        %v1038 = vadd.f32 %v956, %v1006
        %v1039 = vadd.f32 %v957, %v1007
        %s1040 = sld [smem:[#allocation2 + $0xb]]
        %v1041 = vstv %s1040
        %v1042 = vmul.f32 %v214, %v1041
        %v1043 = vmul.f32 %v215, %v1041
        %v1044 = vmul.f32 %v216, %v1041
        %v1045 = vmul.f32 %v217, %v1041
        %v1046 = vmul.f32 %v218, %v1041
        %v1047 = vmul.f32 %v219, %v1041
        %v1048 = vmul.f32 %v220, %v1041
        %v1049 = vmul.f32 %v221, %v1041
        %v1050 = vmul.f32 %v222, %v1041
        %v1051 = vmul.f32 %v223, %v1041
        %v1052 = vmul.f32 %v224, %v1041
        %v1053 = vmul.f32 %v225, %v1041
        %v1054 = vmul.f32 %v226, %v1041
        %v1055 = vmul.f32 %v227, %v1041
        %v1056 = vmul.f32 %v228, %v1041
        %v1057 = vmul.f32 %v229, %v1041
        %v1074 = vrot.slane %v1042, 3
        %v1075 = vrot.slane %v1043, 3
        %v1076 = vrot.slane %v1044, 3
        %v1077 = vrot.slane %v1045, 3
        %v1078 = vrot.slane %v1046, 3
        %v1079 = vrot.slane %v1047, 3
        %v1080 = vrot.slane %v1048, 3
        %v1081 = vrot.slane %v1049, 3
        %v1082 = vrot.slane %v1050, 3
        %v1083 = vrot.slane %v1051, 3
        %v1084 = vrot.slane %v1052, 3
        %v1085 = vrot.slane %v1053, 3
        %v1086 = vrot.slane %v1054, 3
        %v1087 = vrot.slane %v1055, 3
        %v1088 = vrot.slane %v1056, 3
        %v1089 = vrot.slane %v1057, 3
        %v1106 = vadd.f32 %v1024, %v1074
        %v1107 = vadd.f32 %v1025, %v1075
        %v1108 = vadd.f32 %v1026, %v1076
        %v1109 = vadd.f32 %v1027, %v1077
        %v1110 = vadd.f32 %v1028, %v1078
        %v1111 = vadd.f32 %v1029, %v1079
        %v1112 = vadd.f32 %v1030, %v1080
        %v1113 = vadd.f32 %v1031, %v1081
        %v1114 = vadd.f32 %v1032, %v1082
        %v1115 = vadd.f32 %v1033, %v1083
        %v1116 = vadd.f32 %v1034, %v1084
        %v1117 = vadd.f32 %v1035, %v1085
        %v1118 = vadd.f32 %v1036, %v1086
        %v1119 = vadd.f32 %v1037, %v1087
        %v1120 = vadd.f32 %v1038, %v1088
        %v1121 = vadd.f32 %v1039, %v1089
        %s1122 = sld [smem:[#allocation2 + $0xc]]
        %v1123 = vstv %s1122
        %v1124 = vmul.f32 %v214, %v1123
        %v1125 = vmul.f32 %v215, %v1123
        %v1126 = vmul.f32 %v216, %v1123
        %v1127 = vmul.f32 %v217, %v1123
        %v1128 = vmul.f32 %v218, %v1123
        %v1129 = vmul.f32 %v219, %v1123
        %v1130 = vmul.f32 %v220, %v1123
        %v1131 = vmul.f32 %v221, %v1123
        %v1132 = vmul.f32 %v222, %v1123
        %v1133 = vmul.f32 %v223, %v1123
        %v1134 = vmul.f32 %v224, %v1123
        %v1135 = vmul.f32 %v225, %v1123
        %v1136 = vmul.f32 %v226, %v1123
        %v1137 = vmul.f32 %v227, %v1123
        %v1138 = vmul.f32 %v228, %v1123
        %v1139 = vmul.f32 %v229, %v1123
        %v1156 = vrot.slane %v1124, 4
        %v1157 = vrot.slane %v1125, 4
        %v1158 = vrot.slane %v1126, 4
        %v1159 = vrot.slane %v1127, 4
        %v1160 = vrot.slane %v1128, 4
        %v1161 = vrot.slane %v1129, 4
        %v1162 = vrot.slane %v1130, 4
        %v1163 = vrot.slane %v1131, 4
        %v1164 = vrot.slane %v1132, 4
        %v1165 = vrot.slane %v1133, 4
        %v1166 = vrot.slane %v1134, 4
        %v1167 = vrot.slane %v1135, 4
        %v1168 = vrot.slane %v1136, 4
        %v1169 = vrot.slane %v1137, 4
        %v1170 = vrot.slane %v1138, 4
        %v1171 = vrot.slane %v1139, 4
        %v1188 = vadd.f32 %v1106, %v1156
        %v1189 = vadd.f32 %v1107, %v1157
        %v1190 = vadd.f32 %v1108, %v1158
        %v1191 = vadd.f32 %v1109, %v1159
        %v1192 = vadd.f32 %v1110, %v1160
        %v1193 = vadd.f32 %v1111, %v1161
        %v1194 = vadd.f32 %v1112, %v1162
        %v1195 = vadd.f32 %v1113, %v1163
        %v1196 = vadd.f32 %v1114, %v1164
        %v1197 = vadd.f32 %v1115, %v1165
        %v1198 = vadd.f32 %v1116, %v1166
        %v1199 = vadd.f32 %v1117, %v1167
        %v1200 = vadd.f32 %v1118, %v1168
        %v1201 = vadd.f32 %v1119, %v1169
        %v1202 = vadd.f32 %v1120, %v1170
        %v1203 = vadd.f32 %v1121, %v1171
        %s1204 = sld [smem:[#allocation2 + $0xd]]
        %v1205 = vstv %s1204
        %v1206 = vmul.f32 %v214, %v1205
        %v1207 = vmul.f32 %v215, %v1205
        %v1208 = vmul.f32 %v216, %v1205
        %v1209 = vmul.f32 %v217, %v1205
        %v1210 = vmul.f32 %v218, %v1205
        %v1211 = vmul.f32 %v219, %v1205
        %v1212 = vmul.f32 %v220, %v1205
        %v1213 = vmul.f32 %v221, %v1205
        %v1214 = vmul.f32 %v222, %v1205
        %v1215 = vmul.f32 %v223, %v1205
        %v1216 = vmul.f32 %v224, %v1205
        %v1217 = vmul.f32 %v225, %v1205
        %v1218 = vmul.f32 %v226, %v1205
        %v1219 = vmul.f32 %v227, %v1205
        %v1220 = vmul.f32 %v228, %v1205
        %v1221 = vmul.f32 %v229, %v1205
        %v1238 = vrot.slane %v1206, 5
        %v1239 = vrot.slane %v1207, 5
        %v1240 = vrot.slane %v1208, 5
        %v1241 = vrot.slane %v1209, 5
        %v1242 = vrot.slane %v1210, 5
        %v1243 = vrot.slane %v1211, 5
        %v1244 = vrot.slane %v1212, 5
        %v1245 = vrot.slane %v1213, 5
        %v1246 = vrot.slane %v1214, 5
        %v1247 = vrot.slane %v1215, 5
        %v1248 = vrot.slane %v1216, 5
        %v1249 = vrot.slane %v1217, 5
        %v1250 = vrot.slane %v1218, 5
        %v1251 = vrot.slane %v1219, 5
        %v1252 = vrot.slane %v1220, 5
        %v1253 = vrot.slane %v1221, 5
        %v1270 = vadd.f32 %v1188, %v1238
        %v1271 = vadd.f32 %v1189, %v1239
        %v1272 = vadd.f32 %v1190, %v1240
        %v1273 = vadd.f32 %v1191, %v1241
        %v1274 = vadd.f32 %v1192, %v1242
        %v1275 = vadd.f32 %v1193, %v1243
        %v1276 = vadd.f32 %v1194, %v1244
        %v1277 = vadd.f32 %v1195, %v1245
        %v1278 = vadd.f32 %v1196, %v1246
        %v1279 = vadd.f32 %v1197, %v1247
        %v1280 = vadd.f32 %v1198, %v1248
        %v1281 = vadd.f32 %v1199, %v1249
        %v1282 = vadd.f32 %v1200, %v1250
        %v1283 = vadd.f32 %v1201, %v1251
        %v1284 = vadd.f32 %v1202, %v1252
        %v1285 = vadd.f32 %v1203, %v1253
        %s1286 = sld [smem:[#allocation2 + $0xe]]
        %v1287 = vstv %s1286
        %v1288 = vmul.f32 %v214, %v1287
        %v1289 = vmul.f32 %v215, %v1287
        %v1290 = vmul.f32 %v216, %v1287
        %v1291 = vmul.f32 %v217, %v1287
        %v1292 = vmul.f32 %v218, %v1287
        %v1293 = vmul.f32 %v219, %v1287
        %v1294 = vmul.f32 %v220, %v1287
        %v1295 = vmul.f32 %v221, %v1287
        %v1296 = vmul.f32 %v222, %v1287
        %v1297 = vmul.f32 %v223, %v1287
        %v1298 = vmul.f32 %v224, %v1287
        %v1299 = vmul.f32 %v225, %v1287
        %v1300 = vmul.f32 %v226, %v1287
        %v1301 = vmul.f32 %v227, %v1287
        %v1302 = vmul.f32 %v228, %v1287
        %v1303 = vmul.f32 %v229, %v1287
        %v1320 = vrot.slane %v1288, 6
        %v1321 = vrot.slane %v1289, 6
        %v1322 = vrot.slane %v1290, 6
        %v1323 = vrot.slane %v1291, 6
        %v1324 = vrot.slane %v1292, 6
        %v1325 = vrot.slane %v1293, 6
        %v1326 = vrot.slane %v1294, 6
        %v1327 = vrot.slane %v1295, 6
        %v1328 = vrot.slane %v1296, 6
        %v1329 = vrot.slane %v1297, 6
        %v1330 = vrot.slane %v1298, 6
        %v1331 = vrot.slane %v1299, 6
        %v1332 = vrot.slane %v1300, 6
        %v1333 = vrot.slane %v1301, 6
        %v1334 = vrot.slane %v1302, 6
        %v1335 = vrot.slane %v1303, 6
        %v1352 = vadd.f32 %v1270, %v1320
        %v1353 = vadd.f32 %v1271, %v1321
        %v1354 = vadd.f32 %v1272, %v1322
        %v1355 = vadd.f32 %v1273, %v1323
        %v1356 = vadd.f32 %v1274, %v1324
        %v1357 = vadd.f32 %v1275, %v1325
        %v1358 = vadd.f32 %v1276, %v1326
        %v1359 = vadd.f32 %v1277, %v1327
        %v1360 = vadd.f32 %v1278, %v1328
        %v1361 = vadd.f32 %v1279, %v1329
        %v1362 = vadd.f32 %v1280, %v1330
        %v1363 = vadd.f32 %v1281, %v1331
        %v1364 = vadd.f32 %v1282, %v1332
        %v1365 = vadd.f32 %v1283, %v1333
        %v1366 = vadd.f32 %v1284, %v1334
        %v1367 = vadd.f32 %v1285, %v1335
        %s1368 = sld [smem:[#allocation2 + $0xf]]
        %v1369 = vstv %s1368
        %v1370 = vmul.f32 %v214, %v1369
        %v1371 = vmul.f32 %v215, %v1369
        %v1372 = vmul.f32 %v216, %v1369
        %v1373 = vmul.f32 %v217, %v1369
        %v1374 = vmul.f32 %v218, %v1369
        %v1375 = vmul.f32 %v219, %v1369
        %v1376 = vmul.f32 %v220, %v1369
        %v1377 = vmul.f32 %v221, %v1369
        %v1378 = vmul.f32 %v222, %v1369
        %v1379 = vmul.f32 %v223, %v1369
        %v1380 = vmul.f32 %v224, %v1369
        %v1381 = vmul.f32 %v225, %v1369
        %v1382 = vmul.f32 %v226, %v1369
        %v1383 = vmul.f32 %v227, %v1369
        %v1384 = vmul.f32 %v228, %v1369
        %v1385 = vmul.f32 %v229, %v1369
        %v1402 = vrot.slane %v1370, 7
        %v1403 = vrot.slane %v1371, 7
        %v1404 = vrot.slane %v1372, 7
        %v1405 = vrot.slane %v1373, 7
        %v1406 = vrot.slane %v1374, 7
        %v1407 = vrot.slane %v1375, 7
        %v1408 = vrot.slane %v1376, 7
        %v1409 = vrot.slane %v1377, 7
        %v1410 = vrot.slane %v1378, 7
        %v1411 = vrot.slane %v1379, 7
        %v1412 = vrot.slane %v1380, 7
        %v1413 = vrot.slane %v1381, 7
        %v1414 = vrot.slane %v1382, 7
        %v1415 = vrot.slane %v1383, 7
        %v1416 = vrot.slane %v1384, 7
        %v1417 = vrot.slane %v1385, 7
        %v1434 = vadd.f32 %v1352, %v1402
        %v1435 = vadd.f32 %v1353, %v1403
        %v1436 = vadd.f32 %v1354, %v1404
        %v1437 = vadd.f32 %v1355, %v1405
        %v1438 = vadd.f32 %v1356, %v1406
        %v1439 = vadd.f32 %v1357, %v1407
        %v1440 = vadd.f32 %v1358, %v1408
        %v1441 = vadd.f32 %v1359, %v1409
        %v1442 = vadd.f32 %v1360, %v1410
        %v1443 = vadd.f32 %v1361, %v1411
        %v1444 = vadd.f32 %v1362, %v1412
        %v1445 = vadd.f32 %v1363, %v1413
        %v1446 = vadd.f32 %v1364, %v1414
        %v1447 = vadd.f32 %v1365, %v1415
        %v1448 = vadd.f32 %v1366, %v1416
        %v1449 = vadd.f32 %v1367, %v1417
        %v1466 = vrot.slane %v1434, 7
        %v1467 = vrot.slane %v1435, 7
        %v1468 = vrot.slane %v1436, 7
        %v1469 = vrot.slane %v1437, 7
        %v1470 = vrot.slane %v1438, 7
        %v1471 = vrot.slane %v1439, 7
        %v1472 = vrot.slane %v1440, 7
        %v1473 = vrot.slane %v1441, 7
        %v1474 = vrot.slane %v1442, 7
        %v1475 = vrot.slane %v1443, 7
        %v1476 = vrot.slane %v1444, 7
        %v1477 = vrot.slane %v1445, 7
        %v1478 = vrot.slane %v1446, 7
        %v1479 = vrot.slane %v1447, 7
        %v1480 = vrot.slane %v1448, 7
        %v1481 = vrot.slane %v1449, 7
        %vm1498 = vcmask 1040384
        %v1499 = vsel %vm1498, %v824, %v1466
        %v1500 = vsel %vm1498, %v825, %v1467
        %v1501 = vsel %vm1498, %v826, %v1468
        %v1502 = vsel %vm1498, %v827, %v1469
        %v1503 = vsel %vm1498, %v828, %v1470
        %v1504 = vsel %vm1498, %v829, %v1471
        %v1505 = vsel %vm1498, %v830, %v1472
        %v1506 = vsel %vm1498, %v831, %v1473
        %v1507 = vsel %vm1498, %v832, %v1474
        %v1508 = vsel %vm1498, %v833, %v1475
        %v1509 = vsel %vm1498, %v834, %v1476
        %v1510 = vsel %vm1498, %v835, %v1477
        %v1511 = vsel %vm1498, %v836, %v1478
        %v1512 = vsel %vm1498, %v837, %v1479
        %v1513 = vsel %vm1498, %v838, %v1480
        %v1514 = vsel %vm1498, %v839, %v1481
        %v1515 = vmul.f32 %v1499, %v1499
        %v1516 = vmul.f32 %v1500, %v1500
        %v1517 = vmul.f32 %v1501, %v1501
        %v1518 = vmul.f32 %v1502, %v1502
        %v1519 = vmul.f32 %v1503, %v1503
        %v1520 = vmul.f32 %v1504, %v1504
        %v1521 = vmul.f32 %v1505, %v1505
        %v1522 = vmul.f32 %v1506, %v1506
        %v1523 = vmul.f32 %v1507, %v1507
        %v1524 = vmul.f32 %v1508, %v1508
        %v1525 = vmul.f32 %v1509, %v1509
        %v1526 = vmul.f32 %v1510, %v1510
        %v1527 = vmul.f32 %v1511, %v1511
        %v1528 = vmul.f32 %v1512, %v1512
        %v1529 = vmul.f32 %v1513, %v1513
        %v1530 = vmul.f32 %v1514, %v1514
        %v1531 = vmul.f32 %v1515, %v1499
        %v1532 = vmul.f32 %v1516, %v1500
        %v1533 = vmul.f32 %v1517, %v1501
        %v1534 = vmul.f32 %v1518, %v1502
        %v1535 = vmul.f32 %v1519, %v1503
        %v1536 = vmul.f32 %v1520, %v1504
        %v1537 = vmul.f32 %v1521, %v1505
        %v1538 = vmul.f32 %v1522, %v1506
        %v1539 = vmul.f32 %v1523, %v1507
        %v1540 = vmul.f32 %v1524, %v1508
        %v1541 = vmul.f32 %v1525, %v1509
        %v1542 = vmul.f32 %v1526, %v1510
        %v1543 = vmul.f32 %v1527, %v1511
        %v1544 = vmul.f32 %v1528, %v1512
        %v1545 = vmul.f32 %v1529, %v1513
        %v1546 = vmul.f32 %v1530, %v1514
        %v1547 = vmul.f32 %v1531, 0.044715
        %v1548 = vmul.f32 %v1532, 0.044715
        %v1549 = vmul.f32 %v1533, 0.044715
        %v1550 = vmul.f32 %v1534, 0.044715
        %v1551 = vmul.f32 %v1535, 0.044715
        %v1552 = vmul.f32 %v1536, 0.044715
        %v1553 = vmul.f32 %v1537, 0.044715
        %v1554 = vmul.f32 %v1538, 0.044715
        %v1555 = vmul.f32 %v1539, 0.044715
        %v1556 = vmul.f32 %v1540, 0.044715
        %v1557 = vmul.f32 %v1541, 0.044715
        %v1558 = vmul.f32 %v1542, 0.044715
        %v1559 = vmul.f32 %v1543, 0.044715
        %v1560 = vmul.f32 %v1544, 0.044715
        %v1561 = vmul.f32 %v1545, 0.044715
        %v1562 = vmul.f32 %v1546, 0.044715
        %v1563 = vadd.f32 %v1499, %v1547
        %v1564 = vadd.f32 %v1500, %v1548
        %v1565 = vadd.f32 %v1501, %v1549
        %v1566 = vadd.f32 %v1502, %v1550
        %v1567 = vadd.f32 %v1503, %v1551
        %v1568 = vadd.f32 %v1504, %v1552
        %v1569 = vadd.f32 %v1505, %v1553
        %v1570 = vadd.f32 %v1506, %v1554
        %v1571 = vadd.f32 %v1507, %v1555
        %v1572 = vadd.f32 %v1508, %v1556
        %v1573 = vadd.f32 %v1509, %v1557
        %v1574 = vadd.f32 %v1510, %v1558
        %v1575 = vadd.f32 %v1511, %v1559
        %v1576 = vadd.f32 %v1512, %v1560
        %v1577 = vadd.f32 %v1513, %v1561
        %v1578 = vadd.f32 %v1514, %v1562
        %v1579 = vmul.f32 %v1563, 0.7978846
        %v1580 = vmul.f32 %v1564, 0.7978846
        %v1581 = vmul.f32 %v1565, 0.7978846
        %v1582 = vmul.f32 %v1566, 0.7978846
        %v1583 = vmul.f32 %v1567, 0.7978846
        %v1584 = vmul.f32 %v1568, 0.7978846
        %v1585 = vmul.f32 %v1569, 0.7978846
        %v1586 = vmul.f32 %v1570, 0.7978846
        %v1587 = vmul.f32 %v1571, 0.7978846
        %v1588 = vmul.f32 %v1572, 0.7978846
        %v1589 = vmul.f32 %v1573, 0.7978846
        %v1590 = vmul.f32 %v1574, 0.7978846
        %v1591 = vmul.f32 %v1575, 0.7978846
        %v1592 = vmul.f32 %v1576, 0.7978846
        %v1593 = vmul.f32 %v1577, 0.7978846
        %v1594 = vmul.f32 %v1578, 0.7978846
        %v1595 = vtanh.pop %v1579
        %v1596 = vtanh.pop %v1580
        %v1597 = vtanh.pop %v1581
        %v1598 = vtanh.pop %v1582
        %v1599 = vtanh.pop %v1583
        %v1600 = vtanh.pop %v1584
        %v1601 = vtanh.pop %v1585
        %v1602 = vtanh.pop %v1586
        %v1603 = vtanh.pop %v1587
        %v1604 = vtanh.pop %v1588
        %v1605 = vtanh.pop %v1589
        %v1606 = vtanh.pop %v1590
        %v1607 = vtanh.pop %v1591
        %v1608 = vtanh.pop %v1592
        %v1609 = vtanh.pop %v1593
        %v1610 = vtanh.pop %v1594
        %v1611 = vadd.f32 %v1595, 1.0
        %v1612 = vadd.f32 %v1596, 1.0
        %v1613 = vadd.f32 %v1597, 1.0
        %v1614 = vadd.f32 %v1598, 1.0
        %v1615 = vadd.f32 %v1599, 1.0
        %v1616 = vadd.f32 %v1600, 1.0
        %v1617 = vadd.f32 %v1601, 1.0
        %v1618 = vadd.f32 %v1602, 1.0
        %v1619 = vadd.f32 %v1603, 1.0
        %v1620 = vadd.f32 %v1604, 1.0
        %v1621 = vadd.f32 %v1605, 1.0
        %v1622 = vadd.f32 %v1606, 1.0
        %v1623 = vadd.f32 %v1607, 1.0
        %v1624 = vadd.f32 %v1608, 1.0
        %v1625 = vadd.f32 %v1609, 1.0
        %v1626 = vadd.f32 %v1610, 1.0
        %v1627 = vmul.f32 %v1499, %v1611
        %v1628 = vmul.f32 %v1500, %v1612
        %v1629 = vmul.f32 %v1501, %v1613
        %v1630 = vmul.f32 %v1502, %v1614
        %v1631 = vmul.f32 %v1503, %v1615
        %v1632 = vmul.f32 %v1504, %v1616
        %v1633 = vmul.f32 %v1505, %v1617
        %v1634 = vmul.f32 %v1506, %v1618
        %v1635 = vmul.f32 %v1507, %v1619
        %v1636 = vmul.f32 %v1508, %v1620
        %v1637 = vmul.f32 %v1509, %v1621
        %v1638 = vmul.f32 %v1510, %v1622
        %v1639 = vmul.f32 %v1511, %v1623
        %v1640 = vmul.f32 %v1512, %v1624
        %v1641 = vmul.f32 %v1513, %v1625
        %v1642 = vmul.f32 %v1514, %v1626
        %v1659 = vcombine.low %v1627, %v1628
        %v1660 = vcombine.low %v1629, %v1630
        %v1662 = vunpack.c.l.s4 1983009808
        %v1663 = vunpack.c.0.s8 %v1662
        %v1664 = vlaneseq
        %v1665 = vshrl.u32 %v1664, 7
        %v1666 = vsub.s32 %v1663, %v1665
        %v1667 = vrot.slane %v1659, %v1666
        %v1669 = vunpack.c.l.s4 1983009808
        %v1670 = vunpack.c.0.s8 %v1669
        %v1671 = vlaneseq
        %v1672 = vshrl.u32 %v1671, 7
        %v1673 = vsub.s32 %v1670, %v1672
        %v1674 = vrot.slane %v1660, %v1673
        %v1675 = vcombine.low %v1667, %v1674
        %v1676 = vcombine.low %v1631, %v1632
        %v1677 = vcombine.low %v1633, %v1634
        %v1679 = vunpack.c.l.s4 1983009808
        %v1680 = vunpack.c.0.s8 %v1679
        %v1681 = vlaneseq
        %v1682 = vshrl.u32 %v1681, 7
        %v1683 = vsub.s32 %v1680, %v1682
        %v1684 = vrot.slane %v1676, %v1683
        %v1686 = vunpack.c.l.s4 1983009808
        %v1687 = vunpack.c.0.s8 %v1686
        %v1688 = vlaneseq
        %v1689 = vshrl.u32 %v1688, 7
        %v1690 = vsub.s32 %v1687, %v1689
        %v1691 = vrot.slane %v1677, %v1690
        %v1692 = vcombine.low %v1684, %v1691
        %v1693 = vcombine.low %v1635, %v1636
        %v1694 = vcombine.low %v1637, %v1638
        %v1696 = vunpack.c.l.s4 1983009808
        %v1697 = vunpack.c.0.s8 %v1696
        %v1698 = vlaneseq
        %v1699 = vshrl.u32 %v1698, 7
        %v1700 = vsub.s32 %v1697, %v1699
        %v1701 = vrot.slane %v1693, %v1700
        %v1703 = vunpack.c.l.s4 1983009808
        %v1704 = vunpack.c.0.s8 %v1703
        %v1705 = vlaneseq
        %v1706 = vshrl.u32 %v1705, 7
        %v1707 = vsub.s32 %v1704, %v1706
        %v1708 = vrot.slane %v1694, %v1707
        %v1709 = vcombine.low %v1701, %v1708
        %v1710 = vcombine.low %v1639, %v1640
        %v1711 = vcombine.low %v1641, %v1642
        %v1713 = vunpack.c.l.s4 1983009808
        %v1714 = vunpack.c.0.s8 %v1713
        %v1715 = vlaneseq
        %v1716 = vshrl.u32 %v1715, 7
        %v1717 = vsub.s32 %v1714, %v1716
        %v1718 = vrot.slane %v1710, %v1717
        %v1720 = vunpack.c.l.s4 1983009808
        %v1721 = vunpack.c.0.s8 %v1720
        %v1722 = vlaneseq
        %v1723 = vshrl.u32 %v1722, 7
        %v1724 = vsub.s32 %v1721, %v1723
        %v1725 = vrot.slane %v1711, %v1724
        %v1726 = vcombine.low %v1718, %v1725
        %1731 = vst [vmem:[%s211] sm:$0xff] %v1675
        %1732 = vst [vmem:[%s211 + $0x8] sm:$0xff] %v1692
        %1733 = vst [vmem:[%s211 + $0x10] sm:$0xff] %v1709
        %1734 = vst [vmem:[%s211 + $0x18] sm:$0xff] %v1726
        %s1735 = sand.u32 %s98, 1
        %s1736 = scalar_lea.sflag [#allocation4], %s1735
        %s1737 = sand.u32 %s98, 1
        %s1738 = smul.addr %s1737, 32
        %s1739 = scalar_lea.vmem [#allocation9], %s1738
        // Predicated region
        $region45: #{tpu_custom_call.1} parent=31 // pred_check
          %p1740 = pneg %p108
        $region46: #{tpu_custom_call.1} parent=31 // pred_check_branch
          %1742 = sbr.rel (%p1740) target = $region48
        $region47: #{tpu_custom_call.1} parent=31 // pred_region
          %s1743 = smul.u32 16, %s22
          %s1745 = ssub.s32 512, 512
          %1746 = vsyncadd %s1736, %s1745
          %s1747 = smul.addr %s1743, 32
          %s1748 = scalar_lea.hbm %s3, %s1747
          %s1750 = sshll.u32 %s1739, 4
          %s1751 = int_to_ptr.vmem [resolvable:$true] %s1750
          %1753 = dma.vmem_to_hbm [thread:$0]  %s1751, 512, %s1748, %s1736
        $region48: #{tpu_custom_call.1} parent=31 // pred_fallthru
          _
      $region32: #{tpu_custom_call.1} parent=5 // pred_fallthru
        _
      %p1754 = scmp.le.s32.totalorder 2, %s17
      // Predicated region
      $region49: #{tpu_custom_call.1} parent=5 // pred_check
        %p1755 = pneg %p1754
      $region50: #{tpu_custom_call.1} parent=5 // pred_check_branch
        %1757 = sbr.rel (%p1755) target = $region52
      $region51: #{tpu_custom_call.1} parent=5 // pred_region
        %s1758 = ssub.s32 %s17, 2
        // Predicated region
        $region53: #{tpu_custom_call.1} parent=51 // pred_check
          %p1759 = pneg %p114
        $region54: #{tpu_custom_call.1} parent=51 // pred_check_branch
          %1761 = sbr.rel (%p1759) target = $region56
        $region55: #{tpu_custom_call.1} parent=51 // pred_region
          %s1762 = sand.u32 %s99, 1
          %s1763 = scalar_lea.sflag [#allocation4], %s1762
          %s1764 = sand.u32 %s99, 1
          %s1765 = smul.addr %s1764, 32
          %s1766 = scalar_lea.vmem [#allocation9], %s1765
          %1767 = dma.done %s1763, 512
        $region56: #{tpu_custom_call.1} parent=51 // pred_fallthru
          _
      $region52: #{tpu_custom_call.1} parent=5 // pred_fallthru
        _
    $region6: #{tpu_custom_call.1} parent=1 // loop_footer
      %s21 = sadd.s32 1, %s17
    $region7: #{tpu_custom_call.1} parent=1 // loop_footer_branch
      %16 = sbr.rel target = $region3
    $region8: #{tpu_custom_call.1} parent=1 // loop_exit
      _
    %1768 = vsyncpa [#allocation3], 1
    %s1769 = scalar_lea.sflag [#allocation3], 1
    %1770 = vsyncpa %s1769, 1
    %1771 = vsyncpa [#allocation4], 1
    %s1772 = scalar_lea.sflag [#allocation4], 1
    %1773 = vsyncpa %s1772, 1
    %1774 = vsyncpa [#allocation5], 1
    %s1775 = scalar_lea.sflag [#allocation5], 1
    %1776 = vsyncpa %s1775, 1
    %1777 = vsyncpa [#allocation6], 1
    %s1778 = scalar_lea.sflag [#allocation6], 1
    %1779 = vsyncpa %s1778, 1

</llo_original>
